<compile_context>
chip_gen: v7x
topology: tpu7x:2x2x1
jax: 0.10.0
libtpu: 0.0.40
codegen_flags: <defaults>
</compile_context>

<pallas_src>
import jax
import jax.numpy as jnp
from jax.experimental import pallas as pl
from jax.experimental.pallas import tpu as pltpu

LANE = 128       # lane width of a vreg
SUBLANE = 8      # sublane count of an f32 vreg


def _round_up(n, m):
    return (n + m - 1) // m * m


def _tpu_vmem_capacity_bytes():
    """Physical VMEM per core; conservative 64 MiB fallback (v7x per-TC)."""
    try:
        return int(pltpu.get_tpu_info().vmem_capacity_bytes)
    except Exception:
        return 64 * 1024 * 1024


# ----------------------------------------------------------------------------
# Kernel: whole 4-layer forward for one batch tile; everything VMEM resident.
# Matmuls run on the MXU in the weights' dtype (bf16 on the fast path) with
# f32 accumulation; bias add + ReLU happen on the f32 accumulator.
# ----------------------------------------------------------------------------
def dqn_kernel(x_ref, w1_ref, b1_ref, w2_ref, b2_ref, w3_ref, b3_ref,
               wf_ref, bf_ref, o_ref):
    cdt = w1_ref.dtype                       # compute dtype for MXU inputs
    x = x_ref[...].astype(cdt)

    h = jnp.dot(x, w1_ref[...], preferred_element_type=jnp.float32)
    h = jnp.maximum(h + b1_ref[...], 0.0)

    h = jnp.dot(h.astype(cdt), w2_ref[...], preferred_element_type=jnp.float32)
    h = jnp.maximum(h + b2_ref[...], 0.0)

    h = jnp.dot(h.astype(cdt), w3_ref[...], preferred_element_type=jnp.float32)
    h = jnp.maximum(h + b3_ref[...], 0.0)

    out = jnp.dot(h.astype(cdt), wf_ref[...], preferred_element_type=jnp.float32)
    o_ref[...] = (out + bf_ref[...]).astype(o_ref.dtype)


# ----------------------------------------------------------------------------
# One-time parameter preparation (hoisted out of the per-call path).
# Weights are (in_features, out_features) (already transposed vs PyTorch),
# zero-padded so hidden and out dims are multiples of 128 lanes, and cast to
# the compute dtype.  Biases stay f32 (added on the f32 accumulator).
# ----------------------------------------------------------------------------
def prepare_dqn_params(params, weight_dtype=jnp.bfloat16, lane_multiple=LANE):
    in_size, hidden = params["w1"].shape
    out_size = params["wf"].shape[1]
    hp = _round_up(hidden, lane_multiple)     # on v6e/v7x a 256 multiple also works
    op = _round_up(out_size, lane_multiple)

    def pad2(a, rows, cols):
        return jnp.pad(a, ((0, rows - a.shape[0]), (0, cols - a.shape[1])))

    wdt = jnp.dtype(weight_dtype)
    prep = dict(
        w1=pad2(params["w1"], in_size, hp).astype(wdt),
        b1=pad2(params["b1"], 1, hp),
        w2=pad2(params["w2"], hp, hp).astype(wdt),
        b2=pad2(params["b2"], 1, hp),
        w3=pad2(params["w3"], hp, hp).astype(wdt),
        b3=pad2(params["b3"], 1, hp),
        wf=pad2(params["wf"], hp, op).astype(wdt),
        bf=pad2(params["bf"], 1, op),
    )
    meta = dict(in_size=in_size, hidden=hidden, out_size=out_size,
                hidden_pad=hp, out_pad=op, weight_dtype=wdt)
    return prep, meta


# ----------------------------------------------------------------------------
# Forward wrapper: batch tiling + pallas_call.
# ----------------------------------------------------------------------------
def dqn_forward(x, prep, meta, *, batch_tile=None, out_dtype=None,
                vmem_limit_bytes=None):
    B, in_size = x.shape
    assert in_size == meta["in_size"], "input feature mismatch"
    hp, op, out_size = meta["hidden_pad"], meta["out_pad"], meta["out_size"]
    wbytes = meta["weight_dtype"].itemsize

    if out_dtype is None:
        out_dtype = x.dtype
    out_dtype = jnp.dtype(out_dtype)
    obytes = out_dtype.itemsize

    # ---- generation-aware VMEM limit & batch-tile cap ----
    vmem_cap = _tpu_vmem_capacity_bytes()
    if vmem_limit_bytes is None:
        vmem_limit_bytes = int(vmem_cap * 0.82)     # ~105 MiB on 128 MiB, ~52 MiB on 64 MiB
    max_tile = 512 if vmem_cap >= 96 * 1024 * 1024 else 256

    # ---- batch tiling: multiple of 8 sublanes ----
    if batch_tile is None:
        bm = min(_round_up(B, SUBLANE), max_tile)
    else:
        bm = _round_up(batch_tile, SUBLANE)
    B_pad = _round_up(max(B, bm), bm)
    # Ensure >= 2 grid steps when the batch is big enough so both v7x
    # TensorCores get work ("parallel" axis is sharded across cores).
    if batch_tile is None and B_pad // bm == 1 and bm >= 2 * SUBLANE:
        bm = _round_up(bm // 2, SUBLANE)
        B_pad = _round_up(max(B, bm), bm)
    if B_pad != B:
        x = jnp.pad(x, ((0, B_pad - B), (0, 0)))
    grid = (B_pad // bm,)

    # ---- VMEM budget sanity check (bf16 act copies + 15% headroom) ----
    weight_bytes = (in_size * hp + 2 * hp * hp + hp * op) * wbytes
    bias_bytes = (3 * hp + op) * 4
    io_bytes = 2 * (bm * in_size * 4 + bm * op * obytes)   # double-buffered x/out
    act_bytes = 3 * bm * hp * (4 + wbytes)                  # f32 acc + cast copies
    need = int((weight_bytes + bias_bytes + io_bytes + act_bytes) * 1.15)
    assert need < vmem_limit_bytes, (
        "DQN does not fit the VMEM budget; reduce batch_tile, use bf16 "
        "weights, or add a K-tiled grid axis with an f32 accumulator.")

    flops = 2 * B_pad * (in_size * hp + 2 * hp * hp + hp * op)
    bytes_accessed = (B_pad * in_size * 4 + weight_bytes + bias_bytes
                      + B_pad * op * obytes)

    # Constant-across-grid operands: single-buffered.
    def w_spec(shape):
        return pl.BlockSpec(shape, lambda i: (0, 0), pipeline_mode=pl.Buffered(1))

    out = pl.pallas_call(
        dqn_kernel,
        out_shape=jax.ShapeDtypeStruct((B_pad, op), out_dtype),
        grid_spec=pltpu.PrefetchScalarGridSpec(
            num_scalar_prefetch=0,
            grid=grid,
            in_specs=[
                pl.BlockSpec((bm, in_size), lambda i: (i, 0)),   # x tile
                w_spec((in_size, hp)),                           # w1
                w_spec((1, hp)),                                 # b1
                w_spec((hp, hp)),                                # w2
                w_spec((1, hp)),                                 # b2
                w_spec((hp, hp)),                                # w3
                w_spec((1, hp)),                                 # b3
                w_spec((hp, op)),                                # wf
                w_spec((1, op)),                                 # bf
            ],
            out_specs=pl.BlockSpec((bm, op), lambda i: (i, 0)),
        ),
        compiler_params=pltpu.CompilerParams(
            dimension_semantics=("parallel",),
            vmem_limit_bytes=vmem_limit_bytes),
        cost_estimate=pl.CostEstimate(flops=flops, transcendentals=0,
                                      bytes_accessed=bytes_accessed),
    )(x, prep["w1"], prep["b1"], prep["w2"], prep["b2"],
      prep["w3"], prep["b3"], prep["wf"], prep["bf"])

    # Slice away batch padding and the lane-padded output columns.
    return out[:B, :out_size]


# ----------------------------------------------------------------------------
# Init + reference (PyTorch nn.Linear-style uniform +-1/sqrt(fan_in)).
# Weights stored as (in_features, out_features).
# ----------------------------------------------------------------------------
def init_dqn_params(key, in_size, out_size, hidden_size):
    def linear(k, fan_in, fan_out):
        kw, kb = jax.random.split(k)
        bound = 1.0 / jnp.sqrt(jnp.float32(fan_in))
        w = jax.random.uniform(kw, (fan_in, fan_out), jnp.float32, -bound, bound)
        b = jax.random.uniform(kb, (1, fan_out), jnp.float32, -bound, bound)
        return w, b

    k1, k2, k3, k4 = jax.random.split(key, 4)
    w1, b1 = linear(k1, in_size, hidden_size)
    w2, b2 = linear(k2, hidden_size, hidden_size)
    w3, b3 = linear(k3, hidden_size, hidden_size)
    wf, bf = linear(k4, hidden_size, out_size)
    return dict(w1=w1, b1=b1, w2=w2, b2=b2, w3=w3, b3=b3, wf=wf, bf=bf)


def dqn_reference(x, p):
    h1 = jnp.maximum(x @ p["w1"] + p["b1"], 0.0)
    h2 = jnp.maximum(h1 @ p["w2"] + p["b2"], 0.0)
    h3 = jnp.maximum(h2 @ p["w3"] + p["b3"], 0.0)
    return h3 @ p["wf"] + p["bf"]


if __name__ == "__main__":
    key = jax.random.PRNGKey(0)
    kx, kp = jax.random.split(key)

    batch, in_size, hidden_size, out_size = 8, 4, 32, 2
    x = jax.random.normal(kx, (batch, in_size), jnp.float32)
    params = init_dqn_params(kp, in_size, out_size, hidden_size)
    ref = dqn_reference(x, params)

    # Exact-precision path (f32 weights, f32 output) -> tight check.
    prep_f32, meta_f32 = prepare_dqn_params(params, weight_dtype=jnp.float32)
    out_f32 = jax.block_until_ready(
        dqn_forward(x, prep_f32, meta_f32, out_dtype=jnp.float32))
    assert out_f32.shape == (batch, out_size)
    assert jnp.allclose(out_f32, ref, atol=1e-5, rtol=1e-5), "f32 mismatch"

    # Fast path (bf16 weights + bf16 output, f32 accumulation) -> loose check.
    prep_bf16, meta_bf16 = prepare_dqn_params(params, weight_dtype=jnp.bfloat16)
    out_bf16 = jax.block_until_ready(
        dqn_forward(x, prep_bf16, meta_bf16, out_dtype=jnp.bfloat16))
    assert out_bf16.shape == (batch, out_size)
    assert jnp.allclose(out_bf16.astype(jnp.float32), ref,
                        atol=5e-2, rtol=5e-2), "bf16 mismatch"

    print("KERNEL_OK")
</pallas_src>

<mosaic_0001>
module attributes {stable_mosaic.version = 11 : i64} {
  func.func @dqn_kernel(%arg0: i32, %arg1: memref<8x4xf32, #tpu.memory_space<vmem>>, %arg2: memref<4x128xf32, #tpu.memory_space<vmem>>, %arg3: memref<1x128xf32, #tpu.memory_space<vmem>>, %arg4: memref<128x128xf32, #tpu.memory_space<vmem>>, %arg5: memref<1x128xf32, #tpu.memory_space<vmem>>, %arg6: memref<128x128xf32, #tpu.memory_space<vmem>>, %arg7: memref<1x128xf32, #tpu.memory_space<vmem>>, %arg8: memref<128x128xf32, #tpu.memory_space<vmem>>, %arg9: memref<1x128xf32, #tpu.memory_space<vmem>>, %arg10: memref<8x128xf32, #tpu.memory_space<vmem>>) attributes {dimension_semantics = [#tpu.dimension_semantics<parallel>], iteration_bounds = array<i64: 1>, scalar_prefetch = 0 : i64, scratch_operands = 0 : i64, tpu.core_type = #tpu.core_type<tc>, window_params = [{transform_indices = @transform_0, window_bounds = array<i64: 8, 4>}, {pipeline_mode = #tpu.pipeline_mode<synchronous>, transform_indices = @transform_1, window_bounds = array<i64: 4, 128>}, {pipeline_mode = #tpu.pipeline_mode<synchronous>, transform_indices = @transform_2, window_bounds = array<i64: 1, 128>}, {pipeline_mode = #tpu.pipeline_mode<synchronous>, transform_indices = @transform_3, window_bounds = array<i64: 128, 128>}, {pipeline_mode = #tpu.pipeline_mode<synchronous>, transform_indices = @transform_4, window_bounds = array<i64: 1, 128>}, {pipeline_mode = #tpu.pipeline_mode<synchronous>, transform_indices = @transform_5, window_bounds = array<i64: 128, 128>}, {pipeline_mode = #tpu.pipeline_mode<synchronous>, transform_indices = @transform_6, window_bounds = array<i64: 1, 128>}, {pipeline_mode = #tpu.pipeline_mode<synchronous>, transform_indices = @transform_7, window_bounds = array<i64: 128, 128>}, {pipeline_mode = #tpu.pipeline_mode<synchronous>, transform_indices = @transform_8, window_bounds = array<i64: 1, 128>}, {transform_indices = @transform_9, window_bounds = array<i64: 8, 128>}]} {
    %c0 = arith.constant 0 : index
    %c0_0 = arith.constant 0 : index
    %0 = vector.load %arg1[%c0, %c0_0] : memref<8x4xf32, #tpu.memory_space<vmem>>, vector<8x4xf32>
    %c0_1 = arith.constant 0 : index
    %c0_2 = arith.constant 0 : index
    %1 = vector.load %arg2[%c0_1, %c0_2] : memref<4x128xf32, #tpu.memory_space<vmem>>, vector<4x128xf32>
    %cst = arith.constant dense<0.000000e+00> : vector<8x128xf32>
    %2 = tpu.matmul %0, %1, %cst {dimension_numbers = #tpu.dot_dimension_numbers<[1], [0], [0], [1], [0, 0, 1, 1], [], []>} : vector<8x4xf32>, vector<4x128xf32>, vector<8x128xf32> -> vector<8x128xf32>
    %c0_3 = arith.constant 0 : index
    %c0_4 = arith.constant 0 : index
    %3 = vector.load %arg3[%c0_3, %c0_4] : memref<1x128xf32, #tpu.memory_space<vmem>>, vector<1x128xf32>
    %4 = vector.broadcast %3 : vector<1x128xf32> to vector<8x128xf32>
    %5 = arith.addf %2, %4 : vector<8x128xf32>
    %cst_5 = arith.constant 0.000000e+00 : f32
    %6 = vector.broadcast %cst_5 : f32 to vector<8x128xf32>
    %7 = arith.maximumf %5, %6 : vector<8x128xf32>
    %c0_6 = arith.constant 0 : index
    %c0_7 = arith.constant 0 : index
    %8 = vector.load %arg4[%c0_6, %c0_7] : memref<128x128xf32, #tpu.memory_space<vmem>>, vector<128x128xf32>
    %cst_8 = arith.constant dense<0.000000e+00> : vector<8x128xf32>
    %9 = tpu.matmul %7, %8, %cst_8 {dimension_numbers = #tpu.dot_dimension_numbers<[1], [0], [0], [1], [0, 0, 1, 1], [], []>} : vector<8x128xf32>, vector<128x128xf32>, vector<8x128xf32> -> vector<8x128xf32>
    %c0_9 = arith.constant 0 : index
    %c0_10 = arith.constant 0 : index
    %10 = vector.load %arg5[%c0_9, %c0_10] : memref<1x128xf32, #tpu.memory_space<vmem>>, vector<1x128xf32>
    %11 = vector.broadcast %10 : vector<1x128xf32> to vector<8x128xf32>
    %12 = arith.addf %9, %11 : vector<8x128xf32>
    %cst_11 = arith.constant 0.000000e+00 : f32
    %13 = vector.broadcast %cst_11 : f32 to vector<8x128xf32>
    %14 = arith.maximumf %12, %13 : vector<8x128xf32>
    %c0_12 = arith.constant 0 : index
    %c0_13 = arith.constant 0 : index
    %15 = vector.load %arg6[%c0_12, %c0_13] : memref<128x128xf32, #tpu.memory_space<vmem>>, vector<128x128xf32>
    %cst_14 = arith.constant dense<0.000000e+00> : vector<8x128xf32>
    %16 = tpu.matmul %14, %15, %cst_14 {dimension_numbers = #tpu.dot_dimension_numbers<[1], [0], [0], [1], [0, 0, 1, 1], [], []>} : vector<8x128xf32>, vector<128x128xf32>, vector<8x128xf32> -> vector<8x128xf32>
    %c0_15 = arith.constant 0 : index
    %c0_16 = arith.constant 0 : index
    %17 = vector.load %arg7[%c0_15, %c0_16] : memref<1x128xf32, #tpu.memory_space<vmem>>, vector<1x128xf32>
    %18 = vector.broadcast %17 : vector<1x128xf32> to vector<8x128xf32>
    %19 = arith.addf %16, %18 : vector<8x128xf32>
    %cst_17 = arith.constant 0.000000e+00 : f32
    %20 = vector.broadcast %cst_17 : f32 to vector<8x128xf32>
    %21 = arith.maximumf %19, %20 : vector<8x128xf32>
    %c0_18 = arith.constant 0 : index
    %c0_19 = arith.constant 0 : index
    %22 = vector.load %arg8[%c0_18, %c0_19] : memref<128x128xf32, #tpu.memory_space<vmem>>, vector<128x128xf32>
    %cst_20 = arith.constant dense<0.000000e+00> : vector<8x128xf32>
    %23 = tpu.matmul %21, %22, %cst_20 {dimension_numbers = #tpu.dot_dimension_numbers<[1], [0], [0], [1], [0, 0, 1, 1], [], []>} : vector<8x128xf32>, vector<128x128xf32>, vector<8x128xf32> -> vector<8x128xf32>
    %c0_21 = arith.constant 0 : index
    %c0_22 = arith.constant 0 : index
    %24 = vector.load %arg9[%c0_21, %c0_22] : memref<1x128xf32, #tpu.memory_space<vmem>>, vector<1x128xf32>
    %25 = vector.broadcast %24 : vector<1x128xf32> to vector<8x128xf32>
    %26 = arith.addf %23, %25 : vector<8x128xf32>
    %c0_23 = arith.constant 0 : index
    %c0_24 = arith.constant 0 : index
    %27 = vector.load %arg10[%c0_23, %c0_24] : memref<8x128xf32, #tpu.memory_space<vmem>>, vector<8x128xf32>
    tpu.vector_store %arg10[%c0_23, %c0_24], %26 {strides = array<i32>} : memref<8x128xf32, #tpu.memory_space<vmem>>, vector<8x128xf32>,
    return
  }
  func.func @transform_0(%arg0: i32) -> (i32, i32) {
    %c0_i32 = arith.constant 0 : i32
    %c0_i32_0 = arith.constant 0 : i32
    return %arg0, %c0_i32 : i32, i32
  }
  func.func @transform_1(%arg0: i32) -> (i32, i32) {
    %c0_i32 = arith.constant 0 : i32
    %c0_i32_0 = arith.constant 0 : i32
    %c0_i32_1 = arith.constant 0 : i32
    return %c0_i32, %c0_i32_0 : i32, i32
  }
  func.func @transform_2(%arg0: i32) -> (i32, i32) {
    %c0_i32 = arith.constant 0 : i32
    %c0_i32_0 = arith.constant 0 : i32
    %c0_i32_1 = arith.constant 0 : i32
    return %c0_i32, %c0_i32_0 : i32, i32
  }
  func.func @transform_3(%arg0: i32) -> (i32, i32) {
    %c0_i32 = arith.constant 0 : i32
    %c0_i32_0 = arith.constant 0 : i32
    %c0_i32_1 = arith.constant 0 : i32
    return %c0_i32, %c0_i32_0 : i32, i32
  }
  func.func @transform_4(%arg0: i32) -> (i32, i32) {
    %c0_i32 = arith.constant 0 : i32
    %c0_i32_0 = arith.constant 0 : i32
    %c0_i32_1 = arith.constant 0 : i32
    return %c0_i32, %c0_i32_0 : i32, i32
  }
  func.func @transform_5(%arg0: i32) -> (i32, i32) {
    %c0_i32 = arith.constant 0 : i32
    %c0_i32_0 = arith.constant 0 : i32
    %c0_i32_1 = arith.constant 0 : i32
    return %c0_i32, %c0_i32_0 : i32, i32
  }
  func.func @transform_6(%arg0: i32) -> (i32, i32) {
    %c0_i32 = arith.constant 0 : i32
    %c0_i32_0 = arith.constant 0 : i32
    %c0_i32_1 = arith.constant 0 : i32
    return %c0_i32, %c0_i32_0 : i32, i32
  }
  func.func @transform_7(%arg0: i32) -> (i32, i32) {
    %c0_i32 = arith.constant 0 : i32
    %c0_i32_0 = arith.constant 0 : i32
    %c0_i32_1 = arith.constant 0 : i32
    return %c0_i32, %c0_i32_0 : i32, i32
  }
  func.func @transform_8(%arg0: i32) -> (i32, i32) {
    %c0_i32 = arith.constant 0 : i32
    %c0_i32_0 = arith.constant 0 : i32
    %c0_i32_1 = arith.constant 0 : i32
    return %c0_i32, %c0_i32_0 : i32, i32
  }
  func.func @transform_9(%arg0: i32) -> (i32, i32) {
    %c0_i32 = arith.constant 0 : i32
    %c0_i32_0 = arith.constant 0 : i32
    return %arg0, %c0_i32 : i32, i32
  }
}

</mosaic_0001>

<llo_original>
// kernel: tpu_custom_call.1
$region0: #{tpu_custom_call.1}
  #allocation0 [shape = 'u32[]', space=smem, size = 0x4, offset = 0x4, fixed_abs, tag = 'smem constant byte address 0x4 - core index']
  #allocation1 [shape = 'u32[144,128]{1,0:T(1,128)}', space=vmem, size = 0x12000, scoped, tag = 'internal scratch']
  %s0 = inlined_call_operand.vmem [shape: f32[8,4], index: 0, kind: input, shape index: {}]
  %s1 = inlined_call_operand.vmem [shape: f32[4,128], index: 1, kind: input, shape index: {}]
  %s2 = inlined_call_operand.vmem [shape: f32[1,128], index: 2, kind: input, shape index: {}]
  %s3 = inlined_call_operand.hbm [shape: f32[128,128], index: 3, kind: input, shape index: {}]
  %s4 = inlined_call_operand.vmem [shape: f32[1,128], index: 4, kind: input, shape index: {}]
  %s5 = inlined_call_operand.hbm [shape: f32[128,128], index: 5, kind: input, shape index: {}]
  %s6 = inlined_call_operand.vmem [shape: f32[1,128], index: 6, kind: input, shape index: {}]
  %s7 = inlined_call_operand.hbm [shape: f32[128,128], index: 7, kind: input, shape index: {}]
  %s8 = inlined_call_operand.vmem [shape: f32[1,128], index: 8, kind: input, shape index: {}]
  %s9 = inlined_call_operand.hbm [shape: f32[8,128], index: 9, kind: output, shape index: {}]
  %s10 = sld [smem:[#allocation0]]
  $region58: #{tpu_custom_call.1} parent=0
    _
  %s12 = ssub.s32 1, %s10
  %s13 = scalar_select 0, %s12, %s10
  $region1: #{tpu_custom_call.1} parent=0
    #allocation2 [shape = 'u8[65536]{0}', space=vmem, size = 0x10000, scoped, tag = 'input window, operand 3, single buffered']
    #allocation3 [shape = 's32[1]{0}', space=sflag, size = 0x4, scoped, tag = 'scoped memory for tpu_custom_call.1']
    #allocation4 [shape = 's32[1]{0}', space=sflag, size = 0x4, scoped, tag = 'scoped memory for tpu_custom_call.1']
    #allocation5 [shape = 'u8[65536]{0}', space=vmem, size = 0x10000, scoped, tag = 'input window, operand 5, single buffered']
    #allocation6 [shape = 's32[1]{0}', space=sflag, size = 0x4, scoped, tag = 'scoped memory for tpu_custom_call.1']
    #allocation7 [shape = 'u8[65536]{0}', space=vmem, size = 0x10000, scoped, tag = 'input window, operand 7, single buffered']
    #allocation8 [shape = 'u8[4096]{0}', space=vmem, size = 0x1000, scoped, tag = 'output window, operand 0, single buffered']
    %14 = vsyncpa [#allocation3], 0
    %15 = vsyncpa [#allocation6], 0
    %16 = vsyncpa [#allocation4], 0
    // Predicated region
    $region2: #{tpu_custom_call.1} parent=1 // pred_check
      _
    $region3: #{tpu_custom_call.1} parent=1 // pred_check_branch
      %18 = sbr.rel (0) target = $region5
    $region4: #{tpu_custom_call.1} parent=1 // pred_region
      _
    $region5: #{tpu_custom_call.1} parent=1 // pred_fallthru
      _
    // Predicated region
    $region6: #{tpu_custom_call.1} parent=1 // pred_check
      _
    $region7: #{tpu_custom_call.1} parent=1 // pred_check_branch
      %20 = sbr.rel (0) target = $region9
    $region8: #{tpu_custom_call.1} parent=1 // pred_region
      _
    $region9: #{tpu_custom_call.1} parent=1 // pred_fallthru
      _
    // Predicated region
    $region10: #{tpu_custom_call.1} parent=1 // pred_check
      _
    $region11: #{tpu_custom_call.1} parent=1 // pred_check_branch
      %22 = sbr.rel (0) target = $region13
    $region12: #{tpu_custom_call.1} parent=1 // pred_region
      _
    $region13: #{tpu_custom_call.1} parent=1 // pred_fallthru
      _
    // Predicated region
    $region14: #{tpu_custom_call.1} parent=1 // pred_check
      _
    $region15: #{tpu_custom_call.1} parent=1 // pred_check_branch
      %24 = sbr.rel (0) target = $region17
    $region16: #{tpu_custom_call.1} parent=1 // pred_region
      %s26 = ssub.s32 2048, 2048
      %27 = vsyncadd [#allocation3], %s26
      %s28 = sshll.u32 [#allocation2], 4
      %s29 = int_to_ptr.vmem [resolvable:$true] %s28
      %34 = dma.hbm_to_vmem [thread:$0]  %s3, 2048, %s29, [#allocation3], 128, 128, 8
    $region17: #{tpu_custom_call.1} parent=1 // pred_fallthru
      _
    // Predicated region
    $region18: #{tpu_custom_call.1} parent=1 // pred_check
      _
    $region19: #{tpu_custom_call.1} parent=1 // pred_check_branch
      %36 = sbr.rel (0) target = $region21
    $region20: #{tpu_custom_call.1} parent=1 // pred_region
      _
    $region21: #{tpu_custom_call.1} parent=1 // pred_fallthru
      _
    // Predicated region
    $region22: #{tpu_custom_call.1} parent=1 // pred_check
      _
    $region23: #{tpu_custom_call.1} parent=1 // pred_check_branch
      %38 = sbr.rel (0) target = $region25
    $region24: #{tpu_custom_call.1} parent=1 // pred_region
      %s40 = ssub.s32 2048, 2048
      %41 = vsyncadd [#allocation6], %s40
      %s42 = sshll.u32 [#allocation5], 4
      %s43 = int_to_ptr.vmem [resolvable:$true] %s42
      %48 = dma.hbm_to_vmem [thread:$0]  %s5, 2048, %s43, [#allocation6], 128, 128, 8
    $region25: #{tpu_custom_call.1} parent=1 // pred_fallthru
      _
    // Predicated region
    $region26: #{tpu_custom_call.1} parent=1 // pred_check
      _
    $region27: #{tpu_custom_call.1} parent=1 // pred_check_branch
      %50 = sbr.rel (0) target = $region29
    $region28: #{tpu_custom_call.1} parent=1 // pred_region
      _
    $region29: #{tpu_custom_call.1} parent=1 // pred_fallthru
      _
    // Predicated region
    $region30: #{tpu_custom_call.1} parent=1 // pred_check
      _
    $region31: #{tpu_custom_call.1} parent=1 // pred_check_branch
      %52 = sbr.rel (0) target = $region33
    $region32: #{tpu_custom_call.1} parent=1 // pred_region
      %s54 = ssub.s32 2048, 2048
      %55 = vsyncadd [#allocation6], %s54
      %s56 = sshll.u32 [#allocation7], 4
      %s57 = int_to_ptr.vmem [resolvable:$true] %s56
      %62 = dma.hbm_to_vmem [thread:$0]  %s7, 2048, %s57, [#allocation6], 128, 128, 8
    $region33: #{tpu_custom_call.1} parent=1 // pred_fallthru
      _
    // Predicated region
    $region34: #{tpu_custom_call.1} parent=1 // pred_check
      _
    $region35: #{tpu_custom_call.1} parent=1 // pred_check_branch
      %64 = sbr.rel (0) target = $region37
    $region36: #{tpu_custom_call.1} parent=1 // pred_region
      _
    $region37: #{tpu_custom_call.1} parent=1 // pred_fallthru
      _
    // Predicated region
    $region38: #{tpu_custom_call.1} parent=1 // pred_check
      _
    $region39: #{tpu_custom_call.1} parent=1 // pred_check_branch
      %66 = sbr.rel (0) target = $region41
    $region40: #{tpu_custom_call.1} parent=1 // pred_region
      %67 = dma.done [#allocation3], 2048
    $region41: #{tpu_custom_call.1} parent=1 // pred_fallthru
      _
    // Predicated region
    $region42: #{tpu_custom_call.1} parent=1 // pred_check
      _
    $region43: #{tpu_custom_call.1} parent=1 // pred_check_branch
      %69 = sbr.rel (0) target = $region45
    $region44: #{tpu_custom_call.1} parent=1 // pred_region
      %70 = dma.done [#allocation6], 2048
    $region45: #{tpu_custom_call.1} parent=1 // pred_fallthru
      _
    // Predicated region
    $region46: #{tpu_custom_call.1} parent=1 // pred_check
      _
    $region47: #{tpu_custom_call.1} parent=1 // pred_check_branch
      %72 = sbr.rel (0) target = $region49
    $region48: #{tpu_custom_call.1} parent=1 // pred_region
      %73 = dma.done [#allocation6], 2048
    $region49: #{tpu_custom_call.1} parent=1 // pred_fallthru
      _
    %v74 = vld [vmem:[%s0] sm:$0xff]
    %v75 = vld [vmem:[%s1] sm:$0xf]
    %v76 = vld [vmem:[%s2] sm:$0x1]
    %v78 = vlaneseq
    %v79 = vshrl.u32 %v78, 7
    %v80 = vsub.s32 0, %v79
    %v81 = vrot.slane %v76, %v80
    %vm83 = vcmask 31744
    %v85 = vsel %vm83, %v74, 0
    %vm87 = vcmask 1043456
    %v89 = vsel %vm87, %v75, 0
    %91 = vmatprep.subr.mxu0 0.0
    %92 = vmatpush1.msra.mxu0 %v89
    %93 = vmatprep.subr.mxu0 0.0
    %94 = vmatpush1.msra.mxu0 0.0
    %95 = vmatprep.subr.mxu0 0.0
    %96 = vmatpush1.msra.mxu0 0.0
    %97 = vmatprep.subr.mxu0 0.0
    %98 = vmatpush1.msra.mxu0 0.0
    %99 = vmatprep.subr.mxu0 0.0
    %100 = vmatpush1.msra.mxu0 0.0
    %101 = vmatprep.subr.mxu0 0.0
    %102 = vmatpush1.msra.mxu0 0.0
    %103 = vmatprep.subr.mxu0 0.0
    %104 = vmatpush1.msra.mxu0 0.0
    %105 = vmatprep.subr.mxu0 0.0
    %106 = vmatpush1.msra.mxu0 0.0
    %107 = vmatprep.subr.mxu0 0.0
    %108 = vmatpush1.msra.mxu0 0.0
    %109 = vmatprep.subr.mxu0 0.0
    %110 = vmatpush1.msra.mxu0 0.0
    %111 = vmatprep.subr.mxu0 0.0
    %112 = vmatpush1.msra.mxu0 0.0
    %113 = vmatprep.subr.mxu0 0.0
    %114 = vmatpush1.msra.mxu0 0.0
    %115 = vmatprep.subr.mxu0 0.0
    %116 = vmatpush1.msra.mxu0 0.0
    %117 = vmatprep.subr.mxu0 0.0
    %118 = vmatpush1.msra.mxu0 0.0
    %119 = vmatprep.subr.mxu0 0.0
    %120 = vmatpush1.msra.mxu0 0.0
    %121 = vmatprep.subr.mxu0 0.0
    %122 = vmatpush1.msra.mxu0 0.0
    %123 = vmatprep.subr.mxu0 0.0
    %124 = vmatpush1.msra.mxu0 0.0
    %125 = vmatprep.subr.mxu0 0.0
    %126 = vmatpush1.msra.mxu0 0.0
    %127 = vmatprep.subr.mxu0 0.0
    %128 = vmatpush1.msra.mxu0 0.0
    %129 = vmatprep.subr.mxu0 0.0
    %130 = vmatpush1.msra.mxu0 0.0
    %131 = vmatprep.subr.mxu0 0.0
    %132 = vmatpush1.msra.mxu0 0.0
    %133 = vmatprep.subr.mxu0 0.0
    %134 = vmatpush1.msra.mxu0 0.0
    %135 = vmatprep.subr.mxu0 0.0
    %136 = vmatpush1.msra.mxu0 0.0
    %137 = vmatprep.subr.mxu0 0.0
    %138 = vmatpush1.msra.mxu0 0.0
    %139 = vmatprep.subr.mxu0 0.0
    %140 = vmatpush1.msra.mxu0 0.0
    %141 = vmatprep.subr.mxu0 0.0
    %142 = vmatpush1.msra.mxu0 0.0
    %143 = vmatprep.subr.mxu0 0.0
    %144 = vmatpush1.msra.mxu0 0.0
    %145 = vmatprep.subr.mxu0 0.0
    %146 = vmatpush1.msra.mxu0 0.0
    %147 = vmatprep.subr.mxu0 0.0
    %148 = vmatpush1.msra.mxu0 0.0
    %149 = vmatprep.subr.mxu0 0.0
    %150 = vmatpush1.msra.mxu0 0.0
    %151 = vmatprep.subr.mxu0 0.0
    %152 = vmatpush1.msra.mxu0 0.0
    %153 = vmatprep.subr.mxu0 0.0
    %154 = vmatpush1.msra.mxu0 0.0
    %155 = vmatprep.mubr.f32.mxu0 0.0
    %156 = vmatmul.mubr.f32.gmra.mrb[0].mxu0 %v85
    %v157 = vpop.f32.mrb[0].mxu0
    %v158 = vadd.f32 %v81, %v157
    %v159 = vpop.f32.mrb[0].mxu0
    %160 = vdwg.mxu0
    %v161 = vmax.f32 %v158, 0.0
    %v162 = vld [vmem:[#allocation2] sm:$0xff]
    %v163 = vld [vmem:[#allocation2 + $0x8] sm:$0xff]
    %v164 = vld [vmem:[#allocation2 + $0x10] sm:$0xff]
    %v165 = vld [vmem:[#allocation2 + $0x18] sm:$0xff]
    %v166 = vld [vmem:[#allocation2 + $0x20] sm:$0xff]
    %v167 = vld [vmem:[#allocation2 + $0x28] sm:$0xff]
    %v168 = vld [vmem:[#allocation2 + $0x30] sm:$0xff]
    %v169 = vld [vmem:[#allocation2 + $0x38] sm:$0xff]
    %v170 = vld [vmem:[#allocation2 + $0x40] sm:$0xff]
    %v171 = vld [vmem:[#allocation2 + $0x48] sm:$0xff]
    %v172 = vld [vmem:[#allocation2 + $0x50] sm:$0xff]
    %v173 = vld [vmem:[#allocation2 + $0x58] sm:$0xff]
    %v174 = vld [vmem:[#allocation2 + $0x60] sm:$0xff]
    %v175 = vld [vmem:[#allocation2 + $0x68] sm:$0xff]
    %v176 = vld [vmem:[#allocation2 + $0x70] sm:$0xff]
    %v177 = vld [vmem:[#allocation2 + $0x78] sm:$0xff]
    %v178 = vld [vmem:[%s4] sm:$0x1]
    %v180 = vlaneseq
    %v181 = vshrl.u32 %v180, 7
    %v182 = vsub.s32 0, %v181
    %v183 = vrot.slane %v178, %v182
    %185 = vmatprep.subr.mxu0 0.0
    %186 = vmatpush1.msra.mxu0 %v162
    %187 = vmatprep.subr.mxu0 0.0
    %188 = vmatpush1.msra.mxu0 %v163
    %189 = vmatprep.subr.mxu0 0.0
    %190 = vmatpush1.msra.mxu0 %v164
    %191 = vmatprep.subr.mxu0 0.0
    %192 = vmatpush1.msra.mxu0 %v165
    %193 = vmatprep.subr.mxu0 0.0
    %194 = vmatpush1.msra.mxu0 %v166
    %195 = vmatprep.subr.mxu0 0.0
    %196 = vmatpush1.msra.mxu0 %v167
    %197 = vmatprep.subr.mxu0 0.0
    %198 = vmatpush1.msra.mxu0 %v168
    %199 = vmatprep.subr.mxu0 0.0
    %200 = vmatpush1.msra.mxu0 %v169
    %201 = vmatprep.subr.mxu0 0.0
    %202 = vmatpush1.msra.mxu0 %v170
    %203 = vmatprep.subr.mxu0 0.0
    %204 = vmatpush1.msra.mxu0 %v171
    %205 = vmatprep.subr.mxu0 0.0
    %206 = vmatpush1.msra.mxu0 %v172
    %207 = vmatprep.subr.mxu0 0.0
    %208 = vmatpush1.msra.mxu0 %v173
    %209 = vmatprep.subr.mxu0 0.0
    %210 = vmatpush1.msra.mxu0 %v174
    %211 = vmatprep.subr.mxu0 0.0
    %212 = vmatpush1.msra.mxu0 %v175
    %213 = vmatprep.subr.mxu0 0.0
    %214 = vmatpush1.msra.mxu0 %v176
    %215 = vmatprep.subr.mxu0 0.0
    %216 = vmatpush1.msra.mxu0 %v177
    %217 = vmatprep.subr.mxu0 0.0
    %218 = vmatpush1.msra.mxu0 0.0
    %219 = vmatprep.subr.mxu0 0.0
    %220 = vmatpush1.msra.mxu0 0.0
    %221 = vmatprep.subr.mxu0 0.0
    %222 = vmatpush1.msra.mxu0 0.0
    %223 = vmatprep.subr.mxu0 0.0
    %224 = vmatpush1.msra.mxu0 0.0
    %225 = vmatprep.subr.mxu0 0.0
    %226 = vmatpush1.msra.mxu0 0.0
    %227 = vmatprep.subr.mxu0 0.0
    %228 = vmatpush1.msra.mxu0 0.0
    %229 = vmatprep.subr.mxu0 0.0
    %230 = vmatpush1.msra.mxu0 0.0
    %231 = vmatprep.subr.mxu0 0.0
    %232 = vmatpush1.msra.mxu0 0.0
    %233 = vmatprep.subr.mxu0 0.0
    %234 = vmatpush1.msra.mxu0 0.0
    %235 = vmatprep.subr.mxu0 0.0
    %236 = vmatpush1.msra.mxu0 0.0
    %237 = vmatprep.subr.mxu0 0.0
    %238 = vmatpush1.msra.mxu0 0.0
    %239 = vmatprep.subr.mxu0 0.0
    %240 = vmatpush1.msra.mxu0 0.0
    %241 = vmatprep.subr.mxu0 0.0
    %242 = vmatpush1.msra.mxu0 0.0
    %243 = vmatprep.subr.mxu0 0.0
    %244 = vmatpush1.msra.mxu0 0.0
    %245 = vmatprep.subr.mxu0 0.0
    %246 = vmatpush1.msra.mxu0 0.0
    %247 = vmatprep.subr.mxu0 0.0
    %248 = vmatpush1.msra.mxu0 0.0
    %249 = vmatprep.mubr.f32.mxu0 0.0
    %250 = vmatmul.mubr.f32.gmra.mrb[0].mxu0 %v161
    %v251 = vpop.f32.mrb[0].mxu0
    %v252 = vadd.f32 %v183, %v251
    %v253 = vpop.f32.mrb[0].mxu0
    %254 = vdwg.mxu0
    %v255 = vmax.f32 %v252, 0.0
    %v256 = vld [vmem:[#allocation5] sm:$0xff]
    %v257 = vld [vmem:[#allocation5 + $0x8] sm:$0xff]
    %v258 = vld [vmem:[#allocation5 + $0x10] sm:$0xff]
    %v259 = vld [vmem:[#allocation5 + $0x18] sm:$0xff]
    %v260 = vld [vmem:[#allocation5 + $0x20] sm:$0xff]
    %v261 = vld [vmem:[#allocation5 + $0x28] sm:$0xff]
    %v262 = vld [vmem:[#allocation5 + $0x30] sm:$0xff]
    %v263 = vld [vmem:[#allocation5 + $0x38] sm:$0xff]
    %v264 = vld [vmem:[#allocation5 + $0x40] sm:$0xff]
    %v265 = vld [vmem:[#allocation5 + $0x48] sm:$0xff]
    %v266 = vld [vmem:[#allocation5 + $0x50] sm:$0xff]
    %v267 = vld [vmem:[#allocation5 + $0x58] sm:$0xff]
    %v268 = vld [vmem:[#allocation5 + $0x60] sm:$0xff]
    %v269 = vld [vmem:[#allocation5 + $0x68] sm:$0xff]
    %v270 = vld [vmem:[#allocation5 + $0x70] sm:$0xff]
    %v271 = vld [vmem:[#allocation5 + $0x78] sm:$0xff]
    %v272 = vld [vmem:[%s6] sm:$0x1]
    %v274 = vlaneseq
    %v275 = vshrl.u32 %v274, 7
    %v276 = vsub.s32 0, %v275
    %v277 = vrot.slane %v272, %v276
    %279 = vmatprep.subr.mxu0 0.0
    %280 = vmatpush1.msra.mxu0 %v256
    %281 = vmatprep.subr.mxu0 0.0
    %282 = vmatpush1.msra.mxu0 %v257
    %283 = vmatprep.subr.mxu0 0.0
    %284 = vmatpush1.msra.mxu0 %v258
    %285 = vmatprep.subr.mxu0 0.0
    %286 = vmatpush1.msra.mxu0 %v259
    %287 = vmatprep.subr.mxu0 0.0
    %288 = vmatpush1.msra.mxu0 %v260
    %289 = vmatprep.subr.mxu0 0.0
    %290 = vmatpush1.msra.mxu0 %v261
    %291 = vmatprep.subr.mxu0 0.0
    %292 = vmatpush1.msra.mxu0 %v262
    %293 = vmatprep.subr.mxu0 0.0
    %294 = vmatpush1.msra.mxu0 %v263
    %295 = vmatprep.subr.mxu0 0.0
    %296 = vmatpush1.msra.mxu0 %v264
    %297 = vmatprep.subr.mxu0 0.0
    %298 = vmatpush1.msra.mxu0 %v265
    %299 = vmatprep.subr.mxu0 0.0
    %300 = vmatpush1.msra.mxu0 %v266
    %301 = vmatprep.subr.mxu0 0.0
    %302 = vmatpush1.msra.mxu0 %v267
    %303 = vmatprep.subr.mxu0 0.0
    %304 = vmatpush1.msra.mxu0 %v268
    %305 = vmatprep.subr.mxu0 0.0
    %306 = vmatpush1.msra.mxu0 %v269
    %307 = vmatprep.subr.mxu0 0.0
    %308 = vmatpush1.msra.mxu0 %v270
    %309 = vmatprep.subr.mxu0 0.0
    %310 = vmatpush1.msra.mxu0 %v271
    %311 = vmatprep.subr.mxu0 0.0
    %312 = vmatpush1.msra.mxu0 0.0
    %313 = vmatprep.subr.mxu0 0.0
    %314 = vmatpush1.msra.mxu0 0.0
    %315 = vmatprep.subr.mxu0 0.0
    %316 = vmatpush1.msra.mxu0 0.0
    %317 = vmatprep.subr.mxu0 0.0
    %318 = vmatpush1.msra.mxu0 0.0
    %319 = vmatprep.subr.mxu0 0.0
    %320 = vmatpush1.msra.mxu0 0.0
    %321 = vmatprep.subr.mxu0 0.0
    %322 = vmatpush1.msra.mxu0 0.0
    %323 = vmatprep.subr.mxu0 0.0
    %324 = vmatpush1.msra.mxu0 0.0
    %325 = vmatprep.subr.mxu0 0.0
    %326 = vmatpush1.msra.mxu0 0.0
    %327 = vmatprep.subr.mxu0 0.0
    %328 = vmatpush1.msra.mxu0 0.0
    %329 = vmatprep.subr.mxu0 0.0
    %330 = vmatpush1.msra.mxu0 0.0
    %331 = vmatprep.subr.mxu0 0.0
    %332 = vmatpush1.msra.mxu0 0.0
    %333 = vmatprep.subr.mxu0 0.0
    %334 = vmatpush1.msra.mxu0 0.0
    %335 = vmatprep.subr.mxu0 0.0
    %336 = vmatpush1.msra.mxu0 0.0
    %337 = vmatprep.subr.mxu0 0.0
    %338 = vmatpush1.msra.mxu0 0.0
    %339 = vmatprep.subr.mxu0 0.0
    %340 = vmatpush1.msra.mxu0 0.0
    %341 = vmatprep.subr.mxu0 0.0
    %342 = vmatpush1.msra.mxu0 0.0
    %343 = vmatprep.mubr.f32.mxu0 0.0
    %344 = vmatmul.mubr.f32.gmra.mrb[0].mxu0 %v255
    %v345 = vpop.f32.mrb[0].mxu0
    %v346 = vadd.f32 %v277, %v345
    %v347 = vpop.f32.mrb[0].mxu0
    %348 = vdwg.mxu0
    %v349 = vmax.f32 %v346, 0.0
    %v350 = vld [vmem:[#allocation7] sm:$0xff]
    %v351 = vld [vmem:[#allocation7 + $0x8] sm:$0xff]
    %v352 = vld [vmem:[#allocation7 + $0x10] sm:$0xff]
    %v353 = vld [vmem:[#allocation7 + $0x18] sm:$0xff]
    %v354 = vld [vmem:[#allocation7 + $0x20] sm:$0xff]
    %v355 = vld [vmem:[#allocation7 + $0x28] sm:$0xff]
    %v356 = vld [vmem:[#allocation7 + $0x30] sm:$0xff]
    %v357 = vld [vmem:[#allocation7 + $0x38] sm:$0xff]
    %v358 = vld [vmem:[#allocation7 + $0x40] sm:$0xff]
    %v359 = vld [vmem:[#allocation7 + $0x48] sm:$0xff]
    %v360 = vld [vmem:[#allocation7 + $0x50] sm:$0xff]
    %v361 = vld [vmem:[#allocation7 + $0x58] sm:$0xff]
    %v362 = vld [vmem:[#allocation7 + $0x60] sm:$0xff]
    %v363 = vld [vmem:[#allocation7 + $0x68] sm:$0xff]
    %v364 = vld [vmem:[#allocation7 + $0x70] sm:$0xff]
    %v365 = vld [vmem:[#allocation7 + $0x78] sm:$0xff]
    %v366 = vld [vmem:[%s8] sm:$0x1]
    %v368 = vlaneseq
    %v369 = vshrl.u32 %v368, 7
    %v370 = vsub.s32 0, %v369
    %v371 = vrot.slane %v366, %v370
    %373 = vmatprep.subr.mxu0 0.0
    %374 = vmatpush1.msra.mxu0 %v350
    %375 = vmatprep.subr.mxu0 0.0
    %376 = vmatpush1.msra.mxu0 %v351
    %377 = vmatprep.subr.mxu0 0.0
    %378 = vmatpush1.msra.mxu0 %v352
    %379 = vmatprep.subr.mxu0 0.0
    %380 = vmatpush1.msra.mxu0 %v353
    %381 = vmatprep.subr.mxu0 0.0
    %382 = vmatpush1.msra.mxu0 %v354
    %383 = vmatprep.subr.mxu0 0.0
    %384 = vmatpush1.msra.mxu0 %v355
    %385 = vmatprep.subr.mxu0 0.0
    %386 = vmatpush1.msra.mxu0 %v356
    %387 = vmatprep.subr.mxu0 0.0
    %388 = vmatpush1.msra.mxu0 %v357
    %389 = vmatprep.subr.mxu0 0.0
    %390 = vmatpush1.msra.mxu0 %v358
    %391 = vmatprep.subr.mxu0 0.0
    %392 = vmatpush1.msra.mxu0 %v359
    %393 = vmatprep.subr.mxu0 0.0
    %394 = vmatpush1.msra.mxu0 %v360
    %395 = vmatprep.subr.mxu0 0.0
    %396 = vmatpush1.msra.mxu0 %v361
    %397 = vmatprep.subr.mxu0 0.0
    %398 = vmatpush1.msra.mxu0 %v362
    %399 = vmatprep.subr.mxu0 0.0
    %400 = vmatpush1.msra.mxu0 %v363
    %401 = vmatprep.subr.mxu0 0.0
    %402 = vmatpush1.msra.mxu0 %v364
    %403 = vmatprep.subr.mxu0 0.0
    %404 = vmatpush1.msra.mxu0 %v365
    %405 = vmatprep.subr.mxu0 0.0
    %406 = vmatpush1.msra.mxu0 0.0
    %407 = vmatprep.subr.mxu0 0.0
    %408 = vmatpush1.msra.mxu0 0.0
    %409 = vmatprep.subr.mxu0 0.0
    %410 = vmatpush1.msra.mxu0 0.0
    %411 = vmatprep.subr.mxu0 0.0
    %412 = vmatpush1.msra.mxu0 0.0
    %413 = vmatprep.subr.mxu0 0.0
    %414 = vmatpush1.msra.mxu0 0.0
    %415 = vmatprep.subr.mxu0 0.0
    %416 = vmatpush1.msra.mxu0 0.0
    %417 = vmatprep.subr.mxu0 0.0
    %418 = vmatpush1.msra.mxu0 0.0
    %419 = vmatprep.subr.mxu0 0.0
    %420 = vmatpush1.msra.mxu0 0.0
    %421 = vmatprep.subr.mxu0 0.0
    %422 = vmatpush1.msra.mxu0 0.0
    %423 = vmatprep.subr.mxu0 0.0
    %424 = vmatpush1.msra.mxu0 0.0
    %425 = vmatprep.subr.mxu0 0.0
    %426 = vmatpush1.msra.mxu0 0.0
    %427 = vmatprep.subr.mxu0 0.0
    %428 = vmatpush1.msra.mxu0 0.0
    %429 = vmatprep.subr.mxu0 0.0
    %430 = vmatpush1.msra.mxu0 0.0
    %431 = vmatprep.subr.mxu0 0.0
    %432 = vmatpush1.msra.mxu0 0.0
    %433 = vmatprep.subr.mxu0 0.0
    %434 = vmatpush1.msra.mxu0 0.0
    %435 = vmatprep.subr.mxu0 0.0
    %436 = vmatpush1.msra.mxu0 0.0
    %437 = vmatprep.mubr.f32.mxu0 0.0
    %438 = vmatmul.mubr.f32.gmra.mrb[0].mxu0 %v349
    %v439 = vpop.f32.mrb[0].mxu0
    %v440 = vadd.f32 %v371, %v439
    %v441 = vpop.f32.mrb[0].mxu0
    %442 = vdwg.mxu0
    %443 = vst [vmem:[#allocation8] sm:$0xff] %v440
    // Predicated region
    $region50: #{tpu_custom_call.1} parent=1 // pred_check
      _
    $region51: #{tpu_custom_call.1} parent=1 // pred_check_branch
      %445 = sbr.rel (0) target = $region53
    $region52: #{tpu_custom_call.1} parent=1 // pred_region
      %s447 = ssub.s32 128, 128
      %448 = vsyncadd [#allocation4], %s447
      %s450 = sshll.u32 [#allocation8], 4
      %s451 = int_to_ptr.vmem [resolvable:$true] %s450
      %453 = dma.vmem_to_hbm [thread:$0]  %s451, 128, %s9, [#allocation4]
    $region53: #{tpu_custom_call.1} parent=1 // pred_fallthru
      _
    // Predicated region
    $region54: #{tpu_custom_call.1} parent=1 // pred_check
      _
    $region55: #{tpu_custom_call.1} parent=1 // pred_check_branch
      %455 = sbr.rel (0) target = $region57
    $region56: #{tpu_custom_call.1} parent=1 // pred_region
      %456 = dma.done [#allocation4], 128
    $region57: #{tpu_custom_call.1} parent=1 // pred_fallthru
      _
    %457 = vsyncpa [#allocation3], 1
    %458 = vsyncpa [#allocation6], 1
    %459 = vsyncpa [#allocation4], 1

</llo_original>
